<compile_context>
chip_gen: v7x
topology: tpu7x:2x2x1
jax: 0.10.0
libtpu: 0.0.40
codegen_flags: <defaults>
</compile_context>

<pallas_src>
import functools

import jax
import jax.numpy as jnp
from jax.experimental import pallas as pl
from jax.experimental.pallas import tpu as pltpu


C_IN = 3                      # fixed by the module: nn.Conv2d(3, 128, 3, padding=1)
C_OUT = 128
KH = KW = 3
K_RAW = C_IN * KH * KW        # 27 im2col features
K_PAD = 32                    # zero-padded to 32 for clean VMEM layout
BN_EPS = 1e-5


# ----------------------------------------------------------------------------
# Kernel: fused im2col-conv (matmul) + f32 bias/BN epilogue + ReLU + NCHW store.
#   x tile  : (1, TILE_HW, 32)  bf16
#   w       : (32, 128)         bf16
#   b       : (1, 128)          f32
#   o tile  : (1, 128, TILE_HW) out_dtype   (direct NCHW layout)
# ----------------------------------------------------------------------------
def conv_bn_relu_kernel(x_ref, w_ref, b_ref, o_ref):
    acc = jnp.dot(x_ref[0], w_ref[...], preferred_element_type=jnp.float32)
    y = jnp.maximum(acc + b_ref[...], 0.0)                 # f32 epilogue + ReLU
    o_ref[0] = jnp.transpose(y, (1, 0)).astype(o_ref.dtype)


def _choose_tile_hw(hw, n, cap=4096):
    """Spatial tile that divides H*W exactly (no padding copy) and is lane-friendly.

    Also tries to guarantee >= 2 total grid steps so the "parallel" grid axes can
    shard across both TensorCores on v7x even for single-image calls.
    """
    if hw <= cap:
        if n == 1 and hw >= 512 and hw % 256 == 0:
            return hw // 2                    # split one image across both TCs
        return hw                             # full-extent block: always legal
    t = cap - cap % 128
    while t >= 128:
        if hw % t == 0:
            return t
        t -= 128
    return hw                                 # fallback: one full-extent block


def _call_conv_bn_relu(x3d, w_eff, b_eff, out_dtype, tile_hw):
    n, hw, _ = x3d.shape
    grid = (n, hw // tile_hw)
    return pl.pallas_call(
        conv_bn_relu_kernel,
        grid=grid,
        in_specs=[
            pl.BlockSpec((1, tile_hw, K_PAD), lambda i, j: (i, j, 0)),
            pl.BlockSpec((K_PAD, C_OUT), lambda i, j: (0, 0)),   # constant block
            pl.BlockSpec((1, C_OUT), lambda i, j: (0, 0)),       # f32 bias
        ],
        out_specs=pl.BlockSpec((1, C_OUT, tile_hw), lambda i, j: (i, 0, j)),
        out_shape=jax.ShapeDtypeStruct((n, C_OUT, hw), out_dtype),
        compiler_params=pltpu.CompilerParams(
            dimension_semantics=("parallel", "parallel"),   # megacore on v7x
            vmem_limit_bytes=32 * 1024 * 1024,
        ),
    )(x3d, w_eff, b_eff)


# ----------------------------------------------------------------------------
# Glue: im2col (bf16), BN folding, layout plumbing (all inside one jit).
# ----------------------------------------------------------------------------
def _fold_bn(params, compute_dtype):
    """(32,128) conv-as-matmul weight with eval-mode BN folded in + f32 bias."""
    scale = params["bn_gamma"] / jnp.sqrt(params["bn_var"] + BN_EPS)      # (128,)
    # PyTorch OIHW (128,3,3,3) -> (KH,KW,Cin,Cout) -> (27,128); row index
    # (dy*KW + dx)*Cin + ci matches the im2col feature order built below.
    w_mat = jnp.transpose(params["conv_w"], (2, 3, 1, 0)).reshape(K_RAW, C_OUT)
    w_mat = w_mat * scale[None, :]
    w_eff = jnp.concatenate(
        [w_mat, jnp.zeros((K_PAD - K_RAW, C_OUT), w_mat.dtype)], axis=0)
    b_eff = (params["conv_b"] - params["bn_mean"]) * scale + params["bn_beta"]
    return w_eff.astype(compute_dtype), b_eff.reshape(1, C_OUT).astype(jnp.float32)


def _im2col(x_nchw, compute_dtype):
    """(N,3,H,W) -> (N, H*W, 32) bf16 patches (cast BEFORE pad/concat)."""
    n, _, h, w = x_nchw.shape
    x = jnp.transpose(x_nchw.astype(compute_dtype), (0, 2, 3, 1))   # NHWC, bf16
    x = jnp.pad(x, ((0, 0), (1, 1), (1, 1), (0, 0)))                # conv padding=1
    patches = jnp.concatenate(
        [x[:, dy:dy + h, dx:dx + w, :] for dy in range(KH) for dx in range(KW)],
        axis=-1)                                                     # (N,H,W,27)
    x3d = patches.reshape(n, h * w, K_RAW)
    return jnp.pad(x3d, ((0, 0), (0, 0), (0, K_PAD - K_RAW)))        # (N,HW,32)


@functools.partial(jax.jit,
                   static_argnames=("reshape_size", "compute_dtype", "out_dtype"))
def conv_block_forward(s, params, *, reshape_size,
                       compute_dtype=jnp.bfloat16, out_dtype=jnp.float32):
    """ConvBlock.forward: view -> conv3x3(3->128) -> BN(eval) -> ReLU, NCHW out."""
    x = s.reshape(reshape_size)                         # (N,3,H,W), PyTorch .view
    n, c, h, w = x.shape
    assert c == C_IN

    x3d = _im2col(x, compute_dtype)                     # (N, H*W, 32) bf16
    w_eff, b_eff = _fold_bn(params, compute_dtype)

    tile_hw = _choose_tile_hw(h * w, n)
    y = _call_conv_bn_relu(x3d, w_eff, b_eff, out_dtype, tile_hw)   # (N,128,H*W)
    return y.reshape(n, C_OUT, h, w)                    # free reshape -> NCHW


# ----------------------------------------------------------------------------
# Parameter init (PyTorch-layout weights) and a pure-JAX f32 reference.
# ----------------------------------------------------------------------------
def init_params(key):
    ks = jax.random.split(key, 6)
    scale = 0.05

    def rnd(k, shape):
        return scale * jax.random.normal(k, shape, dtype=jnp.float32)

    return dict(
        conv_w=rnd(ks[0], (C_OUT, C_IN, KH, KW)),        # PyTorch OIHW
        conv_b=rnd(ks[1], (C_OUT,)),
        bn_gamma=1.0 + 0.05 * jax.random.normal(ks[2], (C_OUT,), jnp.float32),
        bn_beta=rnd(ks[3], (C_OUT,)),
        bn_mean=rnd(ks[4], (C_OUT,)),
        bn_var=0.5 + jnp.abs(rnd(ks[5], (C_OUT,))),
    )


def _reference_forward(s, params, reshape_size):
    x = s.reshape(reshape_size).astype(jnp.float32)
    y = jax.lax.conv_general_dilated(
        x, params["conv_w"], window_strides=(1, 1), padding="SAME",
        dimension_numbers=("NCHW", "OIHW", "NCHW"))
    y = y + params["conv_b"][None, :, None, None]
    scale = params["bn_gamma"] / jnp.sqrt(params["bn_var"] + BN_EPS)
    y = (y - params["bn_mean"][None, :, None, None]) * scale[None, :, None, None] \
        + params["bn_beta"][None, :, None, None]
    return jnp.maximum(y, 0.0)


if __name__ == "__main__":
    key = jax.random.PRNGKey(0)
    k_in, k_par = jax.random.split(key)

    N, H, W = 2, 16, 16
    RESHAPE_SIZE = (-1, C_IN, H, W)

    # The module's forward starts with s.view(reshape_size): feed a flat input.
    s = jax.random.normal(k_in, (N, C_IN * H * W), dtype=jnp.float32)
    params = init_params(k_par)

    out = conv_block_forward(s, params, reshape_size=RESHAPE_SIZE)
    out = jax.block_until_ready(out)

    assert out.shape == (N, C_OUT, H, W)
    assert out.dtype == jnp.float32
    assert bool(jnp.all(jnp.isfinite(out)))
    assert bool(jnp.all(out >= 0.0))      # ReLU output

    # Compare against a pure-JAX f32 reference.  Only the MXU operands are bf16
    # (bias/BN epilogue is exact f32), so tolerance can be tighter than before.
    ref = _reference_forward(s, params, RESHAPE_SIZE)
    max_err = float(jnp.max(jnp.abs(out - ref)))
    denom = float(jnp.maximum(jnp.max(jnp.abs(ref)), 1.0))
    assert max_err / denom < 0.03, f"mismatch: max_err={max_err}, ref_max={denom}"

    # Optional bf16-output path (halves kernel write traffic if downstream accepts bf16).
    out_bf16 = jax.block_until_ready(
        conv_block_forward(s, params, reshape_size=RESHAPE_SIZE,
                           out_dtype=jnp.bfloat16))
    assert out_bf16.shape == (N, C_OUT, H, W) and out_bf16.dtype == jnp.bfloat16
    assert bool(jnp.all(jnp.isfinite(out_bf16.astype(jnp.float32))))

    print("KERNEL_OK")
</pallas_src>

<mosaic_0001>
module attributes {stable_mosaic.version = 11 : i64} {
  func.func @conv_bn_relu_kernel(%arg0: i32, %arg1: i32, %arg2: memref<1x256x32xbf16, #tpu.memory_space<vmem>>, %arg3: memref<32x128xbf16, #tpu.memory_space<vmem>>, %arg4: memref<1x128xf32, #tpu.memory_space<vmem>>, %arg5: memref<1x128x256xf32, #tpu.memory_space<vmem>>) attributes {dimension_semantics = [#tpu.dimension_semantics<parallel>, #tpu.dimension_semantics<parallel>], iteration_bounds = array<i64: 2, 1>, scalar_prefetch = 0 : i64, scratch_operands = 0 : i64, tpu.core_type = #tpu.core_type<tc>, window_params = [{transform_indices = @transform_0, window_bounds = array<i64: 1, 256, 32>}, {pipeline_mode = #tpu.pipeline_mode<synchronous>, transform_indices = @transform_1, window_bounds = array<i64: 32, 128>}, {pipeline_mode = #tpu.pipeline_mode<synchronous>, transform_indices = @transform_2, window_bounds = array<i64: 1, 128>}, {transform_indices = @transform_3, window_bounds = array<i64: 1, 128, 256>}]} {
    %c0 = arith.constant 0 : index
    %c0_0 = arith.constant 0 : index
    %c0_1 = arith.constant 0 : index
    %0 = vector.load %arg2[%c0, %c0_0, %c0_1] : memref<1x256x32xbf16, #tpu.memory_space<vmem>>, vector<1x256x32xbf16>
    %1 = vector.shape_cast %0 : vector<1x256x32xbf16> to vector<256x32xbf16>
    %c0_2 = arith.constant 0 : index
    %c0_3 = arith.constant 0 : index
    %2 = vector.load %arg3[%c0_2, %c0_3] : memref<32x128xbf16, #tpu.memory_space<vmem>>, vector<32x128xbf16>
    %cst = arith.constant dense<0.000000e+00> : vector<256x128xf32>
    %3 = tpu.matmul %1, %2, %cst {dimension_numbers = #tpu.dot_dimension_numbers<[1], [0], [0], [1], [0, 0, 1, 1], [], []>} : vector<256x32xbf16>, vector<32x128xbf16>, vector<256x128xf32> -> vector<256x128xf32>
    %c0_4 = arith.constant 0 : index
    %c0_5 = arith.constant 0 : index
    %4 = vector.load %arg4[%c0_4, %c0_5] : memref<1x128xf32, #tpu.memory_space<vmem>>, vector<1x128xf32>
    %5 = vector.broadcast %4 : vector<1x128xf32> to vector<256x128xf32>
    %6 = arith.addf %3, %5 : vector<256x128xf32>
    %cst_6 = arith.constant 0.000000e+00 : f32
    %7 = vector.broadcast %cst_6 : f32 to vector<256x128xf32>
    %8 = arith.maximumf %6, %7 : vector<256x128xf32>
    %9 = tpu.transpose %8, [1, 0] : vector<256x128xf32> -> vector<128x256xf32>
    %c0_7 = arith.constant 0 : index
    %c0_8 = arith.constant 0 : index
    %c0_9 = arith.constant 0 : index
    %10 = vector.load %arg5[%c0_7, %c0_8, %c0_9] : memref<1x128x256xf32, #tpu.memory_space<vmem>>, vector<1x128x256xf32>
    %11 = vector.shape_cast %10 : vector<1x128x256xf32> to vector<128x256xf32>
    %12 = vector.shape_cast %9 : vector<128x256xf32> to vector<1x128x256xf32>
    tpu.vector_store %arg5[%c0_7, %c0_8, %c0_9], %12 {strides = array<i32>} : memref<1x128x256xf32, #tpu.memory_space<vmem>>, vector<1x128x256xf32>,
    return
  }
  func.func @transform_0(%arg0: i32, %arg1: i32) -> (i32, i32, i32) {
    %c0_i32 = arith.constant 0 : i32
    %c0_i32_0 = arith.constant 0 : i32
    return %arg0, %arg1, %c0_i32 : i32, i32, i32
  }
  func.func @transform_1(%arg0: i32, %arg1: i32) -> (i32, i32) {
    %c0_i32 = arith.constant 0 : i32
    %c0_i32_0 = arith.constant 0 : i32
    %c0_i32_1 = arith.constant 0 : i32
    return %c0_i32, %c0_i32_0 : i32, i32
  }
  func.func @transform_2(%arg0: i32, %arg1: i32) -> (i32, i32) {
    %c0_i32 = arith.constant 0 : i32
    %c0_i32_0 = arith.constant 0 : i32
    %c0_i32_1 = arith.constant 0 : i32
    return %c0_i32, %c0_i32_0 : i32, i32
  }
  func.func @transform_3(%arg0: i32, %arg1: i32) -> (i32, i32, i32) {
    %c0_i32 = arith.constant 0 : i32
    %c0_i32_0 = arith.constant 0 : i32
    return %arg0, %c0_i32, %arg1 : i32, i32, i32
  }
}

</mosaic_0001>

<llo_original>
// kernel: conv_block_forward.1
$region0: #{conv_block_forward.1}
  #allocation0 [shape = 'u32[]', space=smem, size = 0x4, offset = 0x4, fixed_abs, tag = 'smem constant byte address 0x4 - core index']
  #allocation1 [shape = 'u32[144,128]{1,0:T(1,128)}', space=vmem, size = 0x12000, scoped, tag = 'internal scratch']
  %s0 = inlined_call_operand.vmem [shape: bf16[2,256,32], index: 0, kind: input, shape index: {}]
  %s1 = inlined_call_operand.vmem [shape: bf16[32,128], index: 1, kind: input, shape index: {}]
  %s2 = inlined_call_operand.vmem [shape: f32[1,128], index: 2, kind: input, shape index: {}]
  %s3 = inlined_call_operand.vmem [shape: f32[2,128,256], index: 3, kind: output, shape index: {}]
  %s4 = sld [smem:[#allocation0]]
  $region45: #{conv_block_forward.1} parent=0
    _
  %s6 = ssub.s32 1, %s4
  %s7 = scalar_select 0, %s6, %s4
  loop: start=0, step=1, limit=4
  $region2: #{conv_block_forward.1} parent=0 // loop_pre_header
    _
  $region3: #{conv_block_forward.1} parent=0 // loop_header
    %s9 = sphi 0, %s13
    %p10 = scmp.ge.s32.totalorder %s9, 4
    %s16 = sphi 0, %s28
    %s17 = sphi 0, %s24
    %s18 = sphi 0, %s16
    %s19 = sphi 0, %s17
    %s20 = sphi 0, %s18
    %s21 = sphi 0, %s19
    %s33 = sphi 0, %s35
    %s36 = sphi 0, %s33
    %s37 = sphi 0, %s36
    %s53 = sphi 0, %s37
    %s57 = sphi 0, %s57
    %s59 = sphi 0, %s57
    %s60 = sphi 0, %s59
    %s74 = sphi 0, %s60
    %s78 = sphi 0, %s78
    %s80 = sphi 0, %s78
    %s81 = sphi 0, %s80
    %s95 = sphi 0, %s81
    %s103 = sphi 0, %s105
    %s106 = sphi 0, %s103
    %s107 = sphi 0, %s106
    %s123 = sphi 0, %s107
  $region4: #{conv_block_forward.1} parent=0 // loop_header_branch
    %12 = sbr.rel (%p10) target = $region8
  $region5: #{conv_block_forward.1} parent=0 // loop_body
    %s14 = ssub.s32 %s9, 1
    %s15 = ssub.s32 %s9, 2
    %s22 = sadd.s32 1, %s17
    %p23 = scmp.ge.s32.totalorder %s22, 1
    %s24 = scalar_select %p23, 0, %s22
    %s25 = sadd.s32 1, %s16
    %s26 = scalar_select %p23, %s25, %s16
    %p27 = scmp.ge.s32.totalorder %s26, 2
    %s28 = scalar_select %p27, 0, %s26
    %s29 = ssub.s32 %s16, %s28
    %s30 = ssub.s32 %s17, %s24
    %s31 = sor.u32 %s29, %s30
    %p32 = scmp.eq.s32.totalorder %s31, 0
    %s34 = sadd.s32 %s33, 1
    %s35 = scalar_select %p32, %s33, %s34
    %p38 = pneg %p32
    %p39 = scmp.eq.s32.totalorder %s9, 1
    %p40 = por %p38, %p39
    %p41 = scmp.ne.s32.totalorder %s33, %s36
    %p42 = scmp.eq.s32.totalorder %s9, 0
    %p43 = por %p41, %p42
    %p44 = scmp.ne.s32.totalorder %s33, %s36
    %p45 = scmp.eq.s32.totalorder %s14, 1
    %p46 = por %p44, %p45
    %p47 = scmp.ne.s32.totalorder %s36, %s37
    %p48 = scmp.eq.s32.totalorder %s14, 0
    %p49 = por %p47, %p48
    %p50 = scmp.ne.s32.totalorder %s36, %s37
    %p51 = scmp.eq.s32.totalorder %s15, 1
    %p52 = por %p50, %p51
    %p54 = scmp.ne.s32.totalorder %s37, %s53
    %p55 = scmp.eq.s32.totalorder %s15, 0
    %p56 = por %p54, %p55
    %s58 = sadd.s32 %s57, 1
    %p61 = scmp.eq.s32.totalorder %s9, 1
    %p62 = scmp.ne.s32.totalorder %s57, %s59
    %p63 = scmp.eq.s32.totalorder %s9, 0
    %p64 = por %p62, %p63
    %p65 = scmp.ne.s32.totalorder %s57, %s59
    %p66 = scmp.eq.s32.totalorder %s14, 1
    %p67 = por %p65, %p66
    %p68 = scmp.ne.s32.totalorder %s59, %s60
    %p69 = scmp.eq.s32.totalorder %s14, 0
    %p70 = por %p68, %p69
    %p71 = scmp.ne.s32.totalorder %s59, %s60
    %p72 = scmp.eq.s32.totalorder %s15, 1
    %p73 = por %p71, %p72
    %p75 = scmp.ne.s32.totalorder %s60, %s74
    %p76 = scmp.eq.s32.totalorder %s15, 0
    %p77 = por %p75, %p76
    %s79 = sadd.s32 %s78, 1
    %p82 = scmp.eq.s32.totalorder %s9, 1
    %p83 = scmp.ne.s32.totalorder %s78, %s80
    %p84 = scmp.eq.s32.totalorder %s9, 0
    %p85 = por %p83, %p84
    %p86 = scmp.ne.s32.totalorder %s78, %s80
    %p87 = scmp.eq.s32.totalorder %s14, 1
    %p88 = por %p86, %p87
    %p89 = scmp.ne.s32.totalorder %s80, %s81
    %p90 = scmp.eq.s32.totalorder %s14, 0
    %p91 = por %p89, %p90
    %p92 = scmp.ne.s32.totalorder %s80, %s81
    %p93 = scmp.eq.s32.totalorder %s15, 1
    %p94 = por %p92, %p93
    %p96 = scmp.ne.s32.totalorder %s81, %s95
    %p97 = scmp.eq.s32.totalorder %s15, 0
    %p98 = por %p96, %p97
    %s99 = ssub.s32 %s16, %s28
    %s100 = ssub.s32 %s17, %s24
    %s101 = sor.u32 %s99, %s100
    %p102 = scmp.eq.s32.totalorder %s101, 0
    %s104 = sadd.s32 %s103, 1
    %s105 = scalar_select %p102, %s103, %s104
    %p108 = pneg %p102
    %p109 = scmp.eq.s32.totalorder %s9, 1
    %p110 = por %p108, %p109
    %p111 = scmp.ne.s32.totalorder %s103, %s106
    %p112 = scmp.eq.s32.totalorder %s9, 0
    %p113 = por %p111, %p112
    %p114 = scmp.ne.s32.totalorder %s103, %s106
    %p115 = scmp.eq.s32.totalorder %s14, 1
    %p116 = por %p114, %p115
    %p117 = scmp.ne.s32.totalorder %s106, %s107
    %p118 = scmp.eq.s32.totalorder %s14, 0
    %p119 = por %p117, %p118
    %p120 = scmp.ne.s32.totalorder %s106, %s107
    %p121 = scmp.eq.s32.totalorder %s15, 1
    %p122 = por %p120, %p121
    %p124 = scmp.ne.s32.totalorder %s107, %s123
    %p125 = scmp.eq.s32.totalorder %s15, 0
    %p126 = por %p124, %p125
    %p127 = scmp.le.s32.totalorder 1, %s9
    %p128 = scmp.lt.s32.totalorder %s9, 3
    %p129 = pnand %p127, %p128
    %p130 = pneg %p129
    // Predicated region
    $region9: #{conv_block_forward.1} parent=5 // pred_check
      _
    $region10: #{conv_block_forward.1} parent=5 // pred_check_branch
      %132 = sbr.rel (%p129) target = $region12
    $region11: #{conv_block_forward.1} parent=5 // pred_region
      %s133 = ssub.s32 %s9, 1
      // Predicated region
      $region13: #{conv_block_forward.1} parent=11 // pred_check
        %p134 = pneg %p70
      $region14: #{conv_block_forward.1} parent=11 // pred_check_branch
        %136 = sbr.rel (%p134) target = $region16
      $region15: #{conv_block_forward.1} parent=11 // pred_region
        _
      $region16: #{conv_block_forward.1} parent=11 // pred_fallthru
        _
      // Predicated region
      $region17: #{conv_block_forward.1} parent=11 // pred_check
        %p137 = pneg %p91
      $region18: #{conv_block_forward.1} parent=11 // pred_check_branch
        %139 = sbr.rel (%p137) target = $region20
      $region19: #{conv_block_forward.1} parent=11 // pred_region
        _
      $region20: #{conv_block_forward.1} parent=11 // pred_fallthru
        _
    $region12: #{conv_block_forward.1} parent=5 // pred_fallthru
      _
    %p140 = scmp.lt.s32.totalorder %s9, 2
    // Predicated region
    $region21: #{conv_block_forward.1} parent=5 // pred_check
      %p141 = pneg %p140
    $region22: #{conv_block_forward.1} parent=5 // pred_check_branch
      %143 = sbr.rel (%p141) target = $region24
    $region23: #{conv_block_forward.1} parent=5 // pred_region
      // Predicated region
      $region25: #{conv_block_forward.1} parent=23 // pred_check
        %p144 = pneg %p43
      $region26: #{conv_block_forward.1} parent=23 // pred_check_branch
        %146 = sbr.rel (%p144) target = $region28
      $region27: #{conv_block_forward.1} parent=23 // pred_region
        %s147 = smul.u32 32, %s17
        %p148 = scmp.lt.s32.totalorder %s16, 1
        %s149 = scalar_select %p148, %s16, 1
        %p150 = scmp.lt.s32.totalorder %s147, 31
        %s151 = scalar_select %p150, %s147, 31
        %s152 = smul.addr %s149, 32
        %s153 = sadd.s32 %s151, %s152
        %s154 = smul.addr %s153, 4
        %s155 = scalar_lea.vmem %s0, %s154
        %s156 = smul.u32 32, %s17
      $region28: #{conv_block_forward.1} parent=23 // pred_fallthru
        _
    $region24: #{conv_block_forward.1} parent=5 // pred_fallthru
      _
    %p157 = scmp.le.s32.totalorder 1, %s9
    %p158 = scmp.lt.s32.totalorder %s9, 3
    %p159 = pnand %p157, %p158
    %p160 = pneg %p159
    // Predicated region
    $region29: #{conv_block_forward.1} parent=5 // pred_check
      _
    $region30: #{conv_block_forward.1} parent=5 // pred_check_branch
      %162 = sbr.rel (%p159) target = $region32
    $region31: #{conv_block_forward.1} parent=5 // pred_region
      %s163 = ssub.s32 %s9, 1
      %s164 = smul.u32 32, %s19
      %p165 = scmp.lt.s32.totalorder %s18, 1
      %s166 = scalar_select %p165, %s18, 1
      %p167 = scmp.lt.s32.totalorder %s164, 31
      %s168 = scalar_select %p167, %s164, 31
      %s169 = smul.addr %s166, 32
      %s170 = sadd.s32 %s168, %s169
      %s171 = smul.addr %s170, 4
      %s172 = scalar_lea.vmem %s0, %s171
      %p173 = pneg %p49
      %p174 = pneg %p46
      %p175 = pneg %p70
      %p176 = pneg %p67
      %p177 = pneg %p91
      %p178 = pneg %p88
      %p179 = pneg %p119
      %p180 = pneg %p116
      %s181 = smul.u32 2, %s19
      %p182 = scmp.lt.s32.totalorder %s18, 1
      %s183 = scalar_select %p182, %s18, 1
      %p184 = scmp.lt.s32.totalorder %s181, 1
      %s185 = scalar_select %p184, %s181, 1
      %s186 = smul.addr %s183, 32
      %s187 = sadd.s32 %s185, %s186
      %s188 = smul.addr %s187, 8
      %s189 = scalar_lea.vmem %s3, %s188
      %s190 = smul.u32 32, %s19
      %p191 = scmp.lt.s32.totalorder %s18, 1
      %s192 = scalar_select %p191, %s18, 1
      %p193 = scmp.lt.s32.totalorder %s190, 31
      %s194 = scalar_select %p193, %s190, 31
      %s195 = smul.addr %s192, 32
      %s196 = sadd.s32 %s194, %s195
      %s197 = smul.addr %s196, 4
      %s198 = scalar_lea.vmem %s0, %s197
      %s199 = smul.u32 32, %s19
      %s200 = smul.u32 2, %s19
      %p201 = scmp.lt.s32.totalorder %s18, 1
      %s202 = scalar_select %p201, %s18, 1
      %p203 = scmp.lt.s32.totalorder %s200, 1
      %s204 = scalar_select %p203, %s200, 1
      %s205 = smul.addr %s202, 32
      %s206 = sadd.s32 %s204, %s205
      %s207 = smul.addr %s206, 8
      %s208 = scalar_lea.vmem %s3, %s207
      %s209 = smul.u32 2, %s19
      %v211 = vld [vmem:[%s198] sm:$0xf]
      %v212 = vld [vmem:[%s198 + $0x4] sm:$0xf]
      %v213 = vld [vmem:[%s198 + $0x8] sm:$0xf]
      %v214 = vld [vmem:[%s198 + $0xc] sm:$0xf]
      %v215 = vld [vmem:[%s198 + $0x10] sm:$0xf]
      %v216 = vld [vmem:[%s198 + $0x14] sm:$0xf]
      %v217 = vld [vmem:[%s198 + $0x18] sm:$0xf]
      %v218 = vld [vmem:[%s198 + $0x1c] sm:$0xf]
      %v219 = vld [vmem:[%s198 + $0x20] sm:$0xf]
      %v220 = vld [vmem:[%s198 + $0x24] sm:$0xf]
      %v221 = vld [vmem:[%s198 + $0x28] sm:$0xf]
      %v222 = vld [vmem:[%s198 + $0x2c] sm:$0xf]
      %v223 = vld [vmem:[%s198 + $0x30] sm:$0xf]
      %v224 = vld [vmem:[%s198 + $0x34] sm:$0xf]
      %v225 = vld [vmem:[%s198 + $0x38] sm:$0xf]
      %v226 = vld [vmem:[%s198 + $0x3c] sm:$0xf]
      %v227 = vld [vmem:[%s198 + $0x40] sm:$0xf]
      %v228 = vld [vmem:[%s198 + $0x44] sm:$0xf]
      %v229 = vld [vmem:[%s198 + $0x48] sm:$0xf]
      %v230 = vld [vmem:[%s198 + $0x4c] sm:$0xf]
      %v231 = vld [vmem:[%s198 + $0x50] sm:$0xf]
      %v232 = vld [vmem:[%s198 + $0x54] sm:$0xf]
      %v233 = vld [vmem:[%s198 + $0x58] sm:$0xf]
      %v234 = vld [vmem:[%s198 + $0x5c] sm:$0xf]
      %v235 = vld [vmem:[%s198 + $0x60] sm:$0xf]
      %v236 = vld [vmem:[%s198 + $0x64] sm:$0xf]
      %v237 = vld [vmem:[%s198 + $0x68] sm:$0xf]
      %v238 = vld [vmem:[%s198 + $0x6c] sm:$0xf]
      %v239 = vld [vmem:[%s198 + $0x70] sm:$0xf]
      %v240 = vld [vmem:[%s198 + $0x74] sm:$0xf]
      %v241 = vld [vmem:[%s198 + $0x78] sm:$0xf]
      %v242 = vld [vmem:[%s198 + $0x7c] sm:$0xf]
      %v243 = vld [vmem:[%s1] sm:$0xf]
      %v244 = vld [vmem:[%s1 + $0x4] sm:$0xf]
      %v245 = vld [vmem:[%s1 + $0x8] sm:$0xf]
      %v246 = vld [vmem:[%s1 + $0xc] sm:$0xf]
      %v247 = vld [vmem:[%s2] sm:$0x1]
      %v249 = vlaneseq
      %v250 = vshrl.u32 %v249, 7
      %v251 = vsub.s32 0, %v250
      %v252 = vrot.slane %v247, %v251
      %v286 = vunpack.c.l.b16 %v211
      %v287 = vunpack.c.l.b16 %v212
      %v288 = vunpack.c.l.b16 %v213
      %v289 = vunpack.c.l.b16 %v214
      %v290 = vunpack.c.l.b16 %v215
      %v291 = vunpack.c.l.b16 %v216
      %v292 = vunpack.c.l.b16 %v217
      %v293 = vunpack.c.l.b16 %v218
      %v294 = vunpack.c.l.b16 %v219
      %v295 = vunpack.c.l.b16 %v220
      %v296 = vunpack.c.l.b16 %v221
      %v297 = vunpack.c.l.b16 %v222
      %v298 = vunpack.c.l.b16 %v223
      %v299 = vunpack.c.l.b16 %v224
      %v300 = vunpack.c.l.b16 %v225
      %v301 = vunpack.c.l.b16 %v226
      %v302 = vunpack.c.l.b16 %v227
      %v303 = vunpack.c.l.b16 %v228
      %v304 = vunpack.c.l.b16 %v229
      %v305 = vunpack.c.l.b16 %v230
      %v306 = vunpack.c.l.b16 %v231
      %v307 = vunpack.c.l.b16 %v232
      %v308 = vunpack.c.l.b16 %v233
      %v309 = vunpack.c.l.b16 %v234
      %v310 = vunpack.c.l.b16 %v235
      %v311 = vunpack.c.l.b16 %v236
      %v312 = vunpack.c.l.b16 %v237
      %v313 = vunpack.c.l.b16 %v238
      %v314 = vunpack.c.l.b16 %v239
      %v315 = vunpack.c.l.b16 %v240
      %v316 = vunpack.c.l.b16 %v241
      %v317 = vunpack.c.l.b16 %v242
      %v318 = vpack.c.b16 %v287, %v286
      %v319 = vpack.c.b16 %v289, %v288
      %v320 = vpack.c.b16 %v291, %v290
      %v321 = vpack.c.b16 %v293, %v292
      %v322 = vpack.c.b16 %v295, %v294
      %v323 = vpack.c.b16 %v297, %v296
      %v324 = vpack.c.b16 %v299, %v298
      %v325 = vpack.c.b16 %v301, %v300
      %v326 = vpack.c.b16 %v303, %v302
      %v327 = vpack.c.b16 %v305, %v304
      %v328 = vpack.c.b16 %v307, %v306
      %v329 = vpack.c.b16 %v309, %v308
      %v330 = vpack.c.b16 %v311, %v310
      %v331 = vpack.c.b16 %v313, %v312
      %v332 = vpack.c.b16 %v315, %v314
      %v333 = vpack.c.b16 %v317, %v316
      %v338 = vunpack.c.l.b16 %v243
      %v339 = vunpack.c.l.b16 %v244
      %v340 = vunpack.c.l.b16 %v245
      %v341 = vunpack.c.l.b16 %v246
      %v342 = vpack.c.b16 %v339, %v338
      %v343 = vpack.c.b16 %v341, %v340
      %vm346 = vcmask 261120
      %v348 = vsel %vm346, %v318, 0
      %v351 = vsel %vm346, %v319, 0
      %v354 = vsel %vm346, %v320, 0
      %v357 = vsel %vm346, %v321, 0
      %v360 = vsel %vm346, %v322, 0
      %v363 = vsel %vm346, %v323, 0
      %v366 = vsel %vm346, %v324, 0
      %v369 = vsel %vm346, %v325, 0
      %v372 = vsel %vm346, %v326, 0
      %v375 = vsel %vm346, %v327, 0
      %v378 = vsel %vm346, %v328, 0
      %v381 = vsel %vm346, %v329, 0
      %v384 = vsel %vm346, %v330, 0
      %v387 = vsel %vm346, %v331, 0
      %v390 = vsel %vm346, %v332, 0
      %v393 = vsel %vm346, %v333, 0
      %395 = vmatprep.subr.bf16.mxu0 0
      %396 = vmatpush1.bf16.msra.mxu0 %v342
      %397 = vmatprep.subr.bf16.mxu0 0
      %398 = vmatpush1.bf16.msra.mxu0 %v343
      %399 = vmatprep.subr.bf16.mxu0 0
      %400 = vmatpush1.bf16.msra.mxu0 0
      %401 = vmatprep.subr.bf16.mxu0 0
      %402 = vmatpush1.bf16.msra.mxu0 0
      %403 = vmatprep.subr.bf16.mxu0 0
      %404 = vmatpush1.bf16.msra.mxu0 0
      %405 = vmatprep.subr.bf16.mxu0 0
      %406 = vmatpush1.bf16.msra.mxu0 0
      %407 = vmatprep.subr.bf16.mxu0 0
      %408 = vmatpush1.bf16.msra.mxu0 0
      %409 = vmatprep.subr.bf16.mxu0 0
      %410 = vmatpush1.bf16.msra.mxu0 0
      %411 = vmatprep.subr.bf16.mxu0 0
      %412 = vmatpush1.bf16.msra.mxu0 0
      %413 = vmatprep.subr.bf16.mxu0 0
      %414 = vmatpush1.bf16.msra.mxu0 0
      %415 = vmatprep.subr.bf16.mxu0 0
      %416 = vmatpush1.bf16.msra.mxu0 0
      %417 = vmatprep.subr.bf16.mxu0 0
      %418 = vmatpush1.bf16.msra.mxu0 0
      %419 = vmatprep.subr.bf16.mxu0 0
      %420 = vmatpush1.bf16.msra.mxu0 0
      %421 = vmatprep.subr.bf16.mxu0 0
      %422 = vmatpush1.bf16.msra.mxu0 0
      %423 = vmatprep.subr.bf16.mxu0 0
      %424 = vmatpush1.bf16.msra.mxu0 0
      %425 = vmatprep.subr.bf16.mxu0 0
      %426 = vmatpush1.bf16.msra.mxu0 0
      %427 = vmatprep.mubr.bf16.mxu0 0
      %428 = vmatmul.mubr.bf16.gmra.mrb[0].mxu0 %v348
      %v429 = vpop.f32.mrb[0].mxu0
      %v430 = vadd.f32 %v252, %v429
      %v431 = vpop.f32.mrb[0].mxu0
      %v432 = vpop.f32.mrb[0].mxu0
      %v433 = vadd.f32 %v252, %v432
      %v434 = vpop.f32.mrb[0].mxu0
      %435 = vmatprep.mubr.bf16.mxu0 0
      %436 = vmatmul.mubr.bf16.gmra.mrb[0].mxu0 %v351
      %v437 = vpop.f32.mrb[0].mxu0
      %v438 = vadd.f32 %v252, %v437
      %v439 = vpop.f32.mrb[0].mxu0
      %v440 = vpop.f32.mrb[0].mxu0
      %v441 = vadd.f32 %v252, %v440
      %v442 = vpop.f32.mrb[0].mxu0
      %443 = vmatprep.mubr.bf16.mxu0 0
      %444 = vmatmul.mubr.bf16.gmra.mrb[0].mxu0 %v354
      %v445 = vpop.f32.mrb[0].mxu0
      %v446 = vadd.f32 %v252, %v445
      %v447 = vpop.f32.mrb[0].mxu0
      %v448 = vpop.f32.mrb[0].mxu0
      %v449 = vadd.f32 %v252, %v448
      %v450 = vpop.f32.mrb[0].mxu0
      %451 = vmatprep.mubr.bf16.mxu0 0
      %452 = vmatmul.mubr.bf16.gmra.mrb[0].mxu0 %v357
      %v453 = vpop.f32.mrb[0].mxu0
      %v454 = vadd.f32 %v252, %v453
      %v455 = vpop.f32.mrb[0].mxu0
      %v456 = vpop.f32.mrb[0].mxu0
      %v457 = vadd.f32 %v252, %v456
      %v458 = vpop.f32.mrb[0].mxu0
      %459 = vmatprep.mubr.bf16.mxu0 0
      %460 = vmatmul.mubr.bf16.gmra.mrb[0].mxu0 %v360
      %v461 = vpop.f32.mrb[0].mxu0
      %v462 = vadd.f32 %v252, %v461
      %v463 = vpop.f32.mrb[0].mxu0
      %v464 = vpop.f32.mrb[0].mxu0
      %v465 = vadd.f32 %v252, %v464
      %v466 = vpop.f32.mrb[0].mxu0
      %467 = vmatprep.mubr.bf16.mxu0 0
      %468 = vmatmul.mubr.bf16.gmra.mrb[0].mxu0 %v363
      %v469 = vpop.f32.mrb[0].mxu0
      %v470 = vadd.f32 %v252, %v469
      %v471 = vpop.f32.mrb[0].mxu0
      %v472 = vpop.f32.mrb[0].mxu0
      %v473 = vadd.f32 %v252, %v472
      %v474 = vpop.f32.mrb[0].mxu0
      %475 = vmatprep.mubr.bf16.mxu0 0
      %476 = vmatmul.mubr.bf16.gmra.mrb[0].mxu0 %v366
      %v477 = vpop.f32.mrb[0].mxu0
      %v478 = vadd.f32 %v252, %v477
      %v479 = vpop.f32.mrb[0].mxu0
      %v480 = vpop.f32.mrb[0].mxu0
      %v481 = vadd.f32 %v252, %v480
      %v482 = vpop.f32.mrb[0].mxu0
      %483 = vmatprep.mubr.bf16.mxu0 0
      %484 = vmatmul.mubr.bf16.gmra.mrb[0].mxu0 %v369
      %v485 = vpop.f32.mrb[0].mxu0
      %v486 = vadd.f32 %v252, %v485
      %v487 = vpop.f32.mrb[0].mxu0
      %v488 = vpop.f32.mrb[0].mxu0
      %v489 = vadd.f32 %v252, %v488
      %v490 = vpop.f32.mrb[0].mxu0
      %491 = vmatprep.mubr.bf16.mxu0 0
      %492 = vmatmul.mubr.bf16.gmra.mrb[0].mxu0 %v372
      %v493 = vpop.f32.mrb[0].mxu0
      %v494 = vadd.f32 %v252, %v493
      %v495 = vpop.f32.mrb[0].mxu0
      %v496 = vpop.f32.mrb[0].mxu0
      %v497 = vadd.f32 %v252, %v496
      %v498 = vpop.f32.mrb[0].mxu0
      %499 = vmatprep.mubr.bf16.mxu0 0
      %500 = vmatmul.mubr.bf16.gmra.mrb[0].mxu0 %v375
      %v501 = vpop.f32.mrb[0].mxu0
      %v502 = vadd.f32 %v252, %v501
      %v503 = vpop.f32.mrb[0].mxu0
      %v504 = vpop.f32.mrb[0].mxu0
      %v505 = vadd.f32 %v252, %v504
      %v506 = vpop.f32.mrb[0].mxu0
      %507 = vmatprep.mubr.bf16.mxu0 0
      %508 = vmatmul.mubr.bf16.gmra.mrb[0].mxu0 %v378
      %v509 = vpop.f32.mrb[0].mxu0
      %v510 = vadd.f32 %v252, %v509
      %v511 = vpop.f32.mrb[0].mxu0
      %v512 = vpop.f32.mrb[0].mxu0
      %v513 = vadd.f32 %v252, %v512
      %v514 = vpop.f32.mrb[0].mxu0
      %515 = vmatprep.mubr.bf16.mxu0 0
      %516 = vmatmul.mubr.bf16.gmra.mrb[0].mxu0 %v381
      %v517 = vpop.f32.mrb[0].mxu0
      %v518 = vadd.f32 %v252, %v517
      %v519 = vpop.f32.mrb[0].mxu0
      %v520 = vpop.f32.mrb[0].mxu0
      %v521 = vadd.f32 %v252, %v520
      %v522 = vpop.f32.mrb[0].mxu0
      %523 = vmatprep.mubr.bf16.mxu0 0
      %524 = vmatmul.mubr.bf16.gmra.mrb[0].mxu0 %v384
      %v525 = vpop.f32.mrb[0].mxu0
      %v526 = vadd.f32 %v252, %v525
      %v527 = vpop.f32.mrb[0].mxu0
      %v528 = vpop.f32.mrb[0].mxu0
      %v529 = vadd.f32 %v252, %v528
      %v530 = vpop.f32.mrb[0].mxu0
      %531 = vmatprep.mubr.bf16.mxu0 0
      %532 = vmatmul.mubr.bf16.gmra.mrb[0].mxu0 %v387
      %v533 = vpop.f32.mrb[0].mxu0
      %v534 = vadd.f32 %v252, %v533
      %v535 = vpop.f32.mrb[0].mxu0
      %v536 = vpop.f32.mrb[0].mxu0
      %v537 = vadd.f32 %v252, %v536
      %v538 = vpop.f32.mrb[0].mxu0
      %539 = vmatprep.mubr.bf16.mxu0 0
      %540 = vmatmul.mubr.bf16.gmra.mrb[0].mxu0 %v390
      %v541 = vpop.f32.mrb[0].mxu0
      %v542 = vadd.f32 %v252, %v541
      %v543 = vpop.f32.mrb[0].mxu0
      %v544 = vpop.f32.mrb[0].mxu0
      %v545 = vadd.f32 %v252, %v544
      %v546 = vpop.f32.mrb[0].mxu0
      %547 = vmatprep.mubr.bf16.mxu0 0
      %548 = vmatmul.mubr.bf16.gmra.mrb[0].mxu0 %v393
      %v549 = vpop.f32.mrb[0].mxu0
      %v550 = vadd.f32 %v252, %v549
      %v551 = vpop.f32.mrb[0].mxu0
      %v552 = vpop.f32.mrb[0].mxu0
      %v553 = vadd.f32 %v252, %v552
      %v554 = vpop.f32.mrb[0].mxu0
      %555 = vdwg.mxu0
      %v556 = vmax.f32 %v430, 0.0
      %v557 = vmax.f32 %v433, 0.0
      %v558 = vmax.f32 %v438, 0.0
      %v559 = vmax.f32 %v441, 0.0
      %v560 = vmax.f32 %v446, 0.0
      %v561 = vmax.f32 %v449, 0.0
      %v562 = vmax.f32 %v454, 0.0
      %v563 = vmax.f32 %v457, 0.0
      %v564 = vmax.f32 %v462, 0.0
      %v565 = vmax.f32 %v465, 0.0
      %v566 = vmax.f32 %v470, 0.0
      %v567 = vmax.f32 %v473, 0.0
      %v568 = vmax.f32 %v478, 0.0
      %v569 = vmax.f32 %v481, 0.0
      %v570 = vmax.f32 %v486, 0.0
      %v571 = vmax.f32 %v489, 0.0
      %v572 = vmax.f32 %v494, 0.0
      %v573 = vmax.f32 %v497, 0.0
      %v574 = vmax.f32 %v502, 0.0
      %v575 = vmax.f32 %v505, 0.0
      %v576 = vmax.f32 %v510, 0.0
      %v577 = vmax.f32 %v513, 0.0
      %v578 = vmax.f32 %v518, 0.0
      %v579 = vmax.f32 %v521, 0.0
      %v580 = vmax.f32 %v526, 0.0
      %v581 = vmax.f32 %v529, 0.0
      %v582 = vmax.f32 %v534, 0.0
      %v583 = vmax.f32 %v537, 0.0
      %v584 = vmax.f32 %v542, 0.0
      %v585 = vmax.f32 %v545, 0.0
      %v586 = vmax.f32 %v550, 0.0
      %v587 = vmax.f32 %v553, 0.0
      %588 = vxpose.xlu0.b32.start [1/16] %v556, 128
      %589 = vxpose.xlu0.b32.cont [2/16] %v557, 128
      %590 = vxpose.xlu0.b32.cont [3/16] %v558, 128
      %591 = vxpose.xlu0.b32.cont [4/16] %v559, 128
      %592 = vxpose.xlu0.b32.cont [5/16] %v560, 128
      %593 = vxpose.xlu0.b32.cont [6/16] %v561, 128
      %594 = vxpose.xlu0.b32.cont [7/16] %v562, 128
      %595 = vxpose.xlu0.b32.cont [8/16] %v563, 128
      %596 = vxpose.xlu0.b32.cont [9/16] %v564, 128
      %597 = vxpose.xlu0.b32.cont [10/16] %v565, 128
      %598 = vxpose.xlu0.b32.cont [11/16] %v566, 128
      %599 = vxpose.xlu0.b32.cont [12/16] %v567, 128
      %600 = vxpose.xlu0.b32.cont [13/16] %v568, 128
      %601 = vxpose.xlu0.b32.cont [14/16] %v569, 128
      %602 = vxpose.xlu0.b32.cont [15/16] %v570, 128
      %603 = vxpose.xlu0.b32.end [16/16] %v571, 128
      %v604 = vpop.trf.xlu0
      %v605 = vpop.trf.xlu0
      %v606 = vpop.trf.xlu0
      %v607 = vpop.trf.xlu0
      %v608 = vpop.trf.xlu0
      %v609 = vpop.trf.xlu0
      %v610 = vpop.trf.xlu0
      %v611 = vpop.trf.xlu0
      %v612 = vpop.trf.xlu0
      %v613 = vpop.trf.xlu0
      %v614 = vpop.trf.xlu0
      %v615 = vpop.trf.xlu0
      %v616 = vpop.trf.xlu0
      %v617 = vpop.trf.xlu0
      %v618 = vpop.trf.xlu0
      %v619 = vpop.trf.xlu0
      %620 = vxpose.xlu0.b32.start [1/16] %v572, 128
      %621 = vxpose.xlu0.b32.cont [2/16] %v573, 128
      %622 = vxpose.xlu0.b32.cont [3/16] %v574, 128
      %623 = vxpose.xlu0.b32.cont [4/16] %v575, 128
      %624 = vxpose.xlu0.b32.cont [5/16] %v576, 128
      %625 = vxpose.xlu0.b32.cont [6/16] %v577, 128
      %626 = vxpose.xlu0.b32.cont [7/16] %v578, 128
      %627 = vxpose.xlu0.b32.cont [8/16] %v579, 128
      %628 = vxpose.xlu0.b32.cont [9/16] %v580, 128
      %629 = vxpose.xlu0.b32.cont [10/16] %v581, 128
      %630 = vxpose.xlu0.b32.cont [11/16] %v582, 128
      %631 = vxpose.xlu0.b32.cont [12/16] %v583, 128
      %632 = vxpose.xlu0.b32.cont [13/16] %v584, 128
      %633 = vxpose.xlu0.b32.cont [14/16] %v585, 128
      %634 = vxpose.xlu0.b32.cont [15/16] %v586, 128
      %635 = vxpose.xlu0.b32.end [16/16] %v587, 128
      %v636 = vpop.trf.xlu0
      %v637 = vpop.trf.xlu0
      %v638 = vpop.trf.xlu0
      %v639 = vpop.trf.xlu0
      %v640 = vpop.trf.xlu0
      %v641 = vpop.trf.xlu0
      %v642 = vpop.trf.xlu0
      %v643 = vpop.trf.xlu0
      %v644 = vpop.trf.xlu0
      %v645 = vpop.trf.xlu0
      %v646 = vpop.trf.xlu0
      %v647 = vpop.trf.xlu0
      %v648 = vpop.trf.xlu0
      %v649 = vpop.trf.xlu0
      %v650 = vpop.trf.xlu0
      %v651 = vpop.trf.xlu0
      %652 = vst [vmem:[%s208] sm:$0xff] %v604
      %653 = vst [vmem:[%s208 + $0x8] sm:$0xff] %v636
      %654 = vst [vmem:[%s208 + $0x10] sm:$0xff] %v605
      %655 = vst [vmem:[%s208 + $0x18] sm:$0xff] %v637
      %656 = vst [vmem:[%s208 + $0x20] sm:$0xff] %v606
      %657 = vst [vmem:[%s208 + $0x28] sm:$0xff] %v638
      %658 = vst [vmem:[%s208 + $0x30] sm:$0xff] %v607
      %659 = vst [vmem:[%s208 + $0x38] sm:$0xff] %v639
      %660 = vst [vmem:[%s208 + $0x40] sm:$0xff] %v608
      %661 = vst [vmem:[%s208 + $0x48] sm:$0xff] %v640
      %662 = vst [vmem:[%s208 + $0x50] sm:$0xff] %v609
      %663 = vst [vmem:[%s208 + $0x58] sm:$0xff] %v641
      %664 = vst [vmem:[%s208 + $0x60] sm:$0xff] %v610
      %665 = vst [vmem:[%s208 + $0x68] sm:$0xff] %v642
      %666 = vst [vmem:[%s208 + $0x70] sm:$0xff] %v611
      %667 = vst [vmem:[%s208 + $0x78] sm:$0xff] %v643
      %668 = vst [vmem:[%s208 + $0x80] sm:$0xff] %v612
      %669 = vst [vmem:[%s208 + $0x88] sm:$0xff] %v644
      %670 = vst [vmem:[%s208 + $0x90] sm:$0xff] %v613
      %671 = vst [vmem:[%s208 + $0x98] sm:$0xff] %v645
      %672 = vst [vmem:[%s208 + $0xa0] sm:$0xff] %v614
      %673 = vst [vmem:[%s208 + $0xa8] sm:$0xff] %v646
      %674 = vst [vmem:[%s208 + $0xb0] sm:$0xff] %v615
      %675 = vst [vmem:[%s208 + $0xb8] sm:$0xff] %v647
      %676 = vst [vmem:[%s208 + $0xc0] sm:$0xff] %v616
      %677 = vst [vmem:[%s208 + $0xc8] sm:$0xff] %v648
      %678 = vst [vmem:[%s208 + $0xd0] sm:$0xff] %v617
      %679 = vst [vmem:[%s208 + $0xd8] sm:$0xff] %v649
      %680 = vst [vmem:[%s208 + $0xe0] sm:$0xff] %v618
      %681 = vst [vmem:[%s208 + $0xe8] sm:$0xff] %v650
      %682 = vst [vmem:[%s208 + $0xf0] sm:$0xff] %v619
      %683 = vst [vmem:[%s208 + $0xf8] sm:$0xff] %v651
      %s684 = smul.u32 2, %s19
      %p685 = scmp.lt.s32.totalorder %s18, 1
      %s686 = scalar_select %p685, %s18, 1
      %p687 = scmp.lt.s32.totalorder %s684, 1
      %s688 = scalar_select %p687, %s684, 1
      %s689 = smul.addr %s686, 32
      %s690 = sadd.s32 %s688, %s689
      %s691 = smul.addr %s690, 8
      %s692 = scalar_lea.vmem %s3, %s691
      // Predicated region
      $region33: #{conv_block_forward.1} parent=31 // pred_check
        %p693 = pneg %p116
      $region34: #{conv_block_forward.1} parent=31 // pred_check_branch
        %695 = sbr.rel (%p693) target = $region36
      $region35: #{conv_block_forward.1} parent=31 // pred_region
        %s696 = smul.u32 2, %s19
      $region36: #{conv_block_forward.1} parent=31 // pred_fallthru
        _
    $region32: #{conv_block_forward.1} parent=5 // pred_fallthru
      _
    %p697 = scmp.le.s32.totalorder 2, %s9
    // Predicated region
    $region37: #{conv_block_forward.1} parent=5 // pred_check
      %p698 = pneg %p697
    $region38: #{conv_block_forward.1} parent=5 // pred_check_branch
      %700 = sbr.rel (%p698) target = $region40
    $region39: #{conv_block_forward.1} parent=5 // pred_region
      %s701 = ssub.s32 %s9, 2
      // Predicated region
      $region41: #{conv_block_forward.1} parent=39 // pred_check
        %p702 = pneg %p122
      $region42: #{conv_block_forward.1} parent=39 // pred_check_branch
        %704 = sbr.rel (%p702) target = $region44
      $region43: #{conv_block_forward.1} parent=39 // pred_region
        %s705 = smul.u32 2, %s21
        %p706 = scmp.lt.s32.totalorder %s20, 1
        %s707 = scalar_select %p706, %s20, 1
        %p708 = scmp.lt.s32.totalorder %s705, 1
        %s709 = scalar_select %p708, %s705, 1
        %s710 = smul.addr %s707, 32
        %s711 = sadd.s32 %s709, %s710
        %s712 = smul.addr %s711, 8
        %s713 = scalar_lea.vmem %s3, %s712
      $region44: #{conv_block_forward.1} parent=39 // pred_fallthru
        _
    $region40: #{conv_block_forward.1} parent=5 // pred_fallthru
      _
  $region6: #{conv_block_forward.1} parent=0 // loop_footer
    %s13 = sadd.s32 1, %s9
  $region7: #{conv_block_forward.1} parent=0 // loop_footer_branch
    %8 = sbr.rel target = $region3
  $region8: #{conv_block_forward.1} parent=0 // loop_exit
    _

</llo_original>
